<compile_context>
chip_gen: v7x
topology: tpu7x:2x2x1
jax: 0.10.0
libtpu: 0.0.40
codegen_flags: <defaults>
</compile_context>

<pallas_src>
import functools

import jax
import jax.numpy as jnp
from jax import lax
from jax.experimental import pallas as pl
from jax.experimental.pallas import tpu as pltpu


def _focus_conv_kernel(x_ref, w_ref, b_ref, o_ref):
    # x_ref: (1, K, TM)   w_ref: (C2, K)   b_ref: (C2, 1)   o_ref: (1, C2, TM)
    acc = jnp.dot(
        w_ref[...],
        x_ref[0],
        preferred_element_type=jnp.float32,
        precision=lax.Precision.HIGHEST,
    )  # (C2, TM) f32
    y = acc + b_ref[...]                                      # folded-BN bias
    o_ref[0] = (y * jax.nn.sigmoid(y)).astype(o_ref.dtype)    # SiLU


def focus_forward(x, weight, gamma, beta, running_mean, running_var,
                  eps=1e-5, max_tile_m=8192, vmem_budget_bytes=8 * 1024 * 1024):
    """Focus.forward for k=1, s=1, p=None, g=1, act=True (SiLU), BN in eval mode.

    x:      (N, C1, H, W)  NCHW, H and W even
    weight: (C2, 4*C1, 1, 1) conv weight (no bias, as in ultralytics Conv)
    gamma, beta, running_mean, running_var: (C2,)
    returns: (N, C2, H//2, W//2) NCHW
    """
    N, C1, H, W = x.shape
    assert H % 2 == 0 and W % 2 == 0, "Focus requires even H and W"
    H2, W2 = H // 2, W // 2
    K = 4 * C1
    C2 = weight.shape[0]
    Mp = H2 * W2

    # --- contract(): single pixel-unshuffle relayout; channel order matches
    #     torch.cat([::2,::2], [1::2,::2], [::2,1::2], [1::2,1::2], dim=1),
    #     i.e. K index = (dh + 2*dw)*C1 + c  -> axis order (dw, dh, c). ---
    xk = (
        x.reshape(N, C1, H2, 2, W2, 2)        # (n, c, h2, dh, w2, dw)
        .transpose(0, 5, 3, 1, 2, 4)          # (n, dw, dh, c, h2, w2)
        .reshape(N, K, Mp)                    # (n, K, H2*W2)
    )

    # --- Fold eval-mode BatchNorm: scale into the weight, keep bias only. ---
    f32 = jnp.float32
    inv_std = 1.0 / jnp.sqrt(running_var.astype(f32) + eps)
    scale = gamma.astype(f32) * inv_std                                    # (C2,)
    bias = (beta.astype(f32) - running_mean.astype(f32) * scale).reshape(C2, 1)
    w_scaled = (weight.reshape(C2, K).astype(f32) * scale[:, None]).astype(x.dtype)

    # --- Pixel-axis tile: lane-dense multiple of 128, capped so the
    #     double-buffered (input + output) tiles stay within a VMEM budget. ---
    itemsize = jnp.dtype(x.dtype).itemsize
    bytes_per_pixel = 2 * (K + C2) * itemsize          # 2x for double buffering
    tm_cap = max(vmem_budget_bytes // max(bytes_per_pixel, 1), 128)
    TM = min(int(max_tile_m), int(tm_cap))
    TM = max(128, (TM // 128) * 128)
    if Mp <= TM:
        TM = Mp                                        # full extent: always legal

    grid = (N, pl.cdiv(Mp, TM))

    out = pl.pallas_call(
        _focus_conv_kernel,
        out_shape=jax.ShapeDtypeStruct((N, C2, Mp), x.dtype),
        grid=grid,
        in_specs=[
            pl.BlockSpec((1, K, TM), lambda n, m: (n, 0, m)),   # activation tile
            pl.BlockSpec((C2, K), lambda n, m: (0, 0)),         # BN-folded weight
            pl.BlockSpec((C2, 1), lambda n, m: (0, 0)),         # BN bias
        ],
        out_specs=pl.BlockSpec((1, C2, TM), lambda n, m: (n, 0, m)),
        compiler_params=pltpu.CompilerParams(
            dimension_semantics=("parallel", "parallel"),
        ),
    )(xk, w_scaled, bias)

    # (N, C2, H2*W2) -> NCHW directly, no transpose needed.
    return out.reshape(N, C2, H2, W2)


def _focus_reference(x, weight, gamma, beta, running_mean, running_var, eps=1e-5):
    C2 = weight.shape[0]
    K = weight.shape[1]
    xc = jnp.concatenate(
        [x[..., ::2, ::2], x[..., 1::2, ::2], x[..., ::2, 1::2], x[..., 1::2, 1::2]],
        axis=1,
    )
    conv = jnp.einsum("nkhw,ok->nohw", xc, weight.reshape(C2, K),
                      precision=lax.Precision.HIGHEST)
    inv_std = 1.0 / jnp.sqrt(running_var + eps)
    bn = (conv - running_mean[None, :, None, None]) \
         * (gamma * inv_std)[None, :, None, None] + beta[None, :, None, None]
    return bn * jax.nn.sigmoid(bn)


def _make_params(key, c1, c2, dtype=jnp.float32):
    k_w, k_g, k_b, k_m, k_v = jax.random.split(key, 5)
    K = 4 * c1
    weight = 0.1 * jax.random.normal(k_w, (c2, K, 1, 1), dtype=dtype)
    gamma = 1.0 + 0.05 * jax.random.normal(k_g, (c2,), dtype=dtype)
    beta = 0.05 * jax.random.normal(k_b, (c2,), dtype=dtype)
    rmean = 0.05 * jax.random.normal(k_m, (c2,), dtype=dtype)
    rvar = 1.0 + 0.05 * jnp.abs(jax.random.normal(k_v, (c2,), dtype=dtype))
    return weight, gamma, beta, rmean, rvar


if __name__ == "__main__":
    key = jax.random.PRNGKey(0)
    k1, k2, k3, k4 = jax.random.split(key, 4)

    # --- Test 1: small module-consistent shapes (Focus(c1=4, c2=8)),
    #     single full-extent pixel block. ---
    N, C1, H, W = 2, 4, 16, 16
    C2 = 8
    x = jax.random.normal(k1, (N, C1, H, W), dtype=jnp.float32)
    weight, gamma, beta, rmean, rvar = _make_params(k2, C1, C2)

    focus_fn = jax.jit(focus_forward)
    out = focus_fn(x, weight, gamma, beta, rmean, rvar)
    jax.block_until_ready(out)
    ref = _focus_reference(x, weight, gamma, beta, rmean, rvar)
    assert out.shape == (N, C2, H // 2, W // 2)
    assert jnp.allclose(out, ref, atol=1e-4, rtol=1e-4)

    # --- Test 2: larger spatial size exercising M tiling + partial last block
    #     (Mp = 48*48 = 2304, forced TM = 1024 -> grid m-axis = 3, last block partial)
    N2, C1b, Hb, Wb = 1, 3, 96, 96
    C2b = 32
    xb = jax.random.normal(k3, (N2, C1b, Hb, Wb), dtype=jnp.float32)
    wb, gb, bb, rmb, rvb = _make_params(k4, C1b, C2b)

    focus_fn_tiled = jax.jit(functools.partial(focus_forward, max_tile_m=1024))
    out_b = focus_fn_tiled(xb, wb, gb, bb, rmb, rvb)
    jax.block_until_ready(out_b)
    ref_b = _focus_reference(xb, wb, gb, bb, rmb, rvb)
    assert out_b.shape == (N2, C2b, Hb // 2, Wb // 2)
    assert jnp.allclose(out_b, ref_b, atol=1e-4, rtol=1e-4)

    print("KERNEL_OK")
</pallas_src>

<mosaic_0001>
module attributes {stable_mosaic.version = 11 : i64} {
  func.func @_focus_conv_kernel(%arg0: i32, %arg1: i32, %arg2: memref<1x16x64xf32, #tpu.memory_space<vmem>>, %arg3: memref<8x16xf32, #tpu.memory_space<vmem>>, %arg4: memref<8x1xf32, #tpu.memory_space<vmem>>, %arg5: memref<1x8x64xf32, #tpu.memory_space<vmem>>) attributes {dimension_semantics = [#tpu.dimension_semantics<parallel>, #tpu.dimension_semantics<parallel>], iteration_bounds = array<i64: 2, 1>, scalar_prefetch = 0 : i64, scratch_operands = 0 : i64, tpu.core_type = #tpu.core_type<tc>, window_params = [{transform_indices = @transform_0, window_bounds = array<i64: 1, 16, 64>}, {pipeline_mode = #tpu.pipeline_mode<synchronous>, transform_indices = @transform_1, window_bounds = array<i64: 8, 16>}, {pipeline_mode = #tpu.pipeline_mode<synchronous>, transform_indices = @transform_2, window_bounds = array<i64: 8, 1>}, {transform_indices = @transform_3, window_bounds = array<i64: 1, 8, 64>}]} {
    %c0 = arith.constant 0 : index
    %c0_0 = arith.constant 0 : index
    %0 = vector.load %arg3[%c0, %c0_0] : memref<8x16xf32, #tpu.memory_space<vmem>>, vector<8x16xf32>
    %c0_1 = arith.constant 0 : index
    %c0_2 = arith.constant 0 : index
    %c0_3 = arith.constant 0 : index
    %1 = vector.load %arg2[%c0_1, %c0_2, %c0_3] : memref<1x16x64xf32, #tpu.memory_space<vmem>>, vector<1x16x64xf32>
    %2 = vector.shape_cast %1 : vector<1x16x64xf32> to vector<16x64xf32>
    %cst = arith.constant dense<0.000000e+00> : vector<8x64xf32>
    %3 = tpu.matmul %0, %2, %cst {dimension_numbers = #tpu.dot_dimension_numbers<[1], [0], [0], [1], [0, 0, 1, 1], [], []>, precision = #tpu.contract_precision<fp32>} : vector<8x16xf32>, vector<16x64xf32>, vector<8x64xf32> -> vector<8x64xf32>
    %c0_4 = arith.constant 0 : index
    %c0_5 = arith.constant 0 : index
    %4 = vector.load %arg4[%c0_4, %c0_5] : memref<8x1xf32, #tpu.memory_space<vmem>>, vector<8x1xf32>
    %5 = vector.broadcast %4 : vector<8x1xf32> to vector<8x64xf32>
    %6 = arith.addf %3, %5 : vector<8x64xf32>
    %7 = arith.negf %6 : vector<8x64xf32>
    %8 = math.exp %7 : vector<8x64xf32>
    %cst_6 = arith.constant 1.000000e+00 : f32
    %9 = vector.broadcast %cst_6 : f32 to vector<8x64xf32>
    %10 = arith.addf %9, %8 : vector<8x64xf32>
    %11 = arith.divf %9, %10 : vector<8x64xf32>
    %12 = arith.mulf %6, %11 : vector<8x64xf32>
    %c0_7 = arith.constant 0 : index
    %c0_8 = arith.constant 0 : index
    %c0_9 = arith.constant 0 : index
    %13 = vector.load %arg5[%c0_7, %c0_8, %c0_9] : memref<1x8x64xf32, #tpu.memory_space<vmem>>, vector<1x8x64xf32>
    %14 = vector.shape_cast %13 : vector<1x8x64xf32> to vector<8x64xf32>
    %15 = vector.shape_cast %12 : vector<8x64xf32> to vector<1x8x64xf32>
    tpu.vector_store %arg5[%c0_7, %c0_8, %c0_9], %15 {strides = array<i32>} : memref<1x8x64xf32, #tpu.memory_space<vmem>>, vector<1x8x64xf32>,
    return
  }
  func.func @transform_0(%arg0: i32, %arg1: i32) -> (i32, i32, i32) {
    %c0_i32 = arith.constant 0 : i32
    %c0_i32_0 = arith.constant 0 : i32
    return %arg0, %c0_i32, %arg1 : i32, i32, i32
  }
  func.func @transform_1(%arg0: i32, %arg1: i32) -> (i32, i32) {
    %c0_i32 = arith.constant 0 : i32
    %c0_i32_0 = arith.constant 0 : i32
    %c0_i32_1 = arith.constant 0 : i32
    return %c0_i32, %c0_i32_0 : i32, i32
  }
  func.func @transform_2(%arg0: i32, %arg1: i32) -> (i32, i32) {
    %c0_i32 = arith.constant 0 : i32
    %c0_i32_0 = arith.constant 0 : i32
    %c0_i32_1 = arith.constant 0 : i32
    return %c0_i32, %c0_i32_0 : i32, i32
  }
  func.func @transform_3(%arg0: i32, %arg1: i32) -> (i32, i32, i32) {
    %c0_i32 = arith.constant 0 : i32
    %c0_i32_0 = arith.constant 0 : i32
    return %arg0, %c0_i32, %arg1 : i32, i32, i32
  }
}

</mosaic_0001>

<llo_original>
// kernel: focus_forward.1
$region0: #{focus_forward.1}
  #allocation0 [shape = 'u32[]', space=smem, size = 0x4, offset = 0x4, fixed_abs, tag = 'smem constant byte address 0x4 - core index']
  #allocation1 [shape = 'u32[144,128]{1,0:T(1,128)}', space=vmem, size = 0x12000, scoped, tag = 'internal scratch']
  %s0 = inlined_call_operand.vmem [shape: f32[2,16,64], index: 0, kind: input, shape index: {}]
  %s1 = inlined_call_operand.vmem [shape: f32[8,16], index: 1, kind: input, shape index: {}]
  %s2 = inlined_call_operand.vmem [shape: f32[8,1], index: 2, kind: input, shape index: {}]
  %s3 = inlined_call_operand.vmem [shape: f32[2,8,64], index: 3, kind: output, shape index: {}]
  %s4 = sld [smem:[#allocation0]]
  $region45: #{focus_forward.1} parent=0
    _
  %s6 = ssub.s32 1, %s4
  %s7 = scalar_select 0, %s6, %s4
  loop: start=0, step=1, limit=4
  $region2: #{focus_forward.1} parent=0 // loop_pre_header
    _
  $region3: #{focus_forward.1} parent=0 // loop_header
    %s9 = sphi 0, %s13
    %p10 = scmp.ge.s32.totalorder %s9, 4
    %s16 = sphi 0, %s28
    %s17 = sphi 0, %s24
    %s18 = sphi 0, %s16
    %s19 = sphi 0, %s17
    %s20 = sphi 0, %s18
    %s21 = sphi 0, %s19
    %s33 = sphi 0, %s35
    %s36 = sphi 0, %s33
    %s37 = sphi 0, %s36
    %s53 = sphi 0, %s37
    %s57 = sphi 0, %s57
    %s59 = sphi 0, %s57
    %s60 = sphi 0, %s59
    %s74 = sphi 0, %s60
    %s78 = sphi 0, %s78
    %s80 = sphi 0, %s78
    %s81 = sphi 0, %s80
    %s95 = sphi 0, %s81
    %s103 = sphi 0, %s105
    %s106 = sphi 0, %s103
    %s107 = sphi 0, %s106
    %s123 = sphi 0, %s107
  $region4: #{focus_forward.1} parent=0 // loop_header_branch
    %12 = sbr.rel (%p10) target = $region8
  $region5: #{focus_forward.1} parent=0 // loop_body
    %s14 = ssub.s32 %s9, 1
    %s15 = ssub.s32 %s9, 2
    %s22 = sadd.s32 1, %s17
    %p23 = scmp.ge.s32.totalorder %s22, 1
    %s24 = scalar_select %p23, 0, %s22
    %s25 = sadd.s32 1, %s16
    %s26 = scalar_select %p23, %s25, %s16
    %p27 = scmp.ge.s32.totalorder %s26, 2
    %s28 = scalar_select %p27, 0, %s26
    %s29 = ssub.s32 %s16, %s28
    %s30 = ssub.s32 %s17, %s24
    %s31 = sor.u32 %s29, %s30
    %p32 = scmp.eq.s32.totalorder %s31, 0
    %s34 = sadd.s32 %s33, 1
    %s35 = scalar_select %p32, %s33, %s34
    %p38 = pneg %p32
    %p39 = scmp.eq.s32.totalorder %s9, 1
    %p40 = por %p38, %p39
    %p41 = scmp.ne.s32.totalorder %s33, %s36
    %p42 = scmp.eq.s32.totalorder %s9, 0
    %p43 = por %p41, %p42
    %p44 = scmp.ne.s32.totalorder %s33, %s36
    %p45 = scmp.eq.s32.totalorder %s14, 1
    %p46 = por %p44, %p45
    %p47 = scmp.ne.s32.totalorder %s36, %s37
    %p48 = scmp.eq.s32.totalorder %s14, 0
    %p49 = por %p47, %p48
    %p50 = scmp.ne.s32.totalorder %s36, %s37
    %p51 = scmp.eq.s32.totalorder %s15, 1
    %p52 = por %p50, %p51
    %p54 = scmp.ne.s32.totalorder %s37, %s53
    %p55 = scmp.eq.s32.totalorder %s15, 0
    %p56 = por %p54, %p55
    %s58 = sadd.s32 %s57, 1
    %p61 = scmp.eq.s32.totalorder %s9, 1
    %p62 = scmp.ne.s32.totalorder %s57, %s59
    %p63 = scmp.eq.s32.totalorder %s9, 0
    %p64 = por %p62, %p63
    %p65 = scmp.ne.s32.totalorder %s57, %s59
    %p66 = scmp.eq.s32.totalorder %s14, 1
    %p67 = por %p65, %p66
    %p68 = scmp.ne.s32.totalorder %s59, %s60
    %p69 = scmp.eq.s32.totalorder %s14, 0
    %p70 = por %p68, %p69
    %p71 = scmp.ne.s32.totalorder %s59, %s60
    %p72 = scmp.eq.s32.totalorder %s15, 1
    %p73 = por %p71, %p72
    %p75 = scmp.ne.s32.totalorder %s60, %s74
    %p76 = scmp.eq.s32.totalorder %s15, 0
    %p77 = por %p75, %p76
    %s79 = sadd.s32 %s78, 1
    %p82 = scmp.eq.s32.totalorder %s9, 1
    %p83 = scmp.ne.s32.totalorder %s78, %s80
    %p84 = scmp.eq.s32.totalorder %s9, 0
    %p85 = por %p83, %p84
    %p86 = scmp.ne.s32.totalorder %s78, %s80
    %p87 = scmp.eq.s32.totalorder %s14, 1
    %p88 = por %p86, %p87
    %p89 = scmp.ne.s32.totalorder %s80, %s81
    %p90 = scmp.eq.s32.totalorder %s14, 0
    %p91 = por %p89, %p90
    %p92 = scmp.ne.s32.totalorder %s80, %s81
    %p93 = scmp.eq.s32.totalorder %s15, 1
    %p94 = por %p92, %p93
    %p96 = scmp.ne.s32.totalorder %s81, %s95
    %p97 = scmp.eq.s32.totalorder %s15, 0
    %p98 = por %p96, %p97
    %s99 = ssub.s32 %s16, %s28
    %s100 = ssub.s32 %s17, %s24
    %s101 = sor.u32 %s99, %s100
    %p102 = scmp.eq.s32.totalorder %s101, 0
    %s104 = sadd.s32 %s103, 1
    %s105 = scalar_select %p102, %s103, %s104
    %p108 = pneg %p102
    %p109 = scmp.eq.s32.totalorder %s9, 1
    %p110 = por %p108, %p109
    %p111 = scmp.ne.s32.totalorder %s103, %s106
    %p112 = scmp.eq.s32.totalorder %s9, 0
    %p113 = por %p111, %p112
    %p114 = scmp.ne.s32.totalorder %s103, %s106
    %p115 = scmp.eq.s32.totalorder %s14, 1
    %p116 = por %p114, %p115
    %p117 = scmp.ne.s32.totalorder %s106, %s107
    %p118 = scmp.eq.s32.totalorder %s14, 0
    %p119 = por %p117, %p118
    %p120 = scmp.ne.s32.totalorder %s106, %s107
    %p121 = scmp.eq.s32.totalorder %s15, 1
    %p122 = por %p120, %p121
    %p124 = scmp.ne.s32.totalorder %s107, %s123
    %p125 = scmp.eq.s32.totalorder %s15, 0
    %p126 = por %p124, %p125
    %p127 = scmp.le.s32.totalorder 1, %s9
    %p128 = scmp.lt.s32.totalorder %s9, 3
    %p129 = pnand %p127, %p128
    %p130 = pneg %p129
    // Predicated region
    $region9: #{focus_forward.1} parent=5 // pred_check
      _
    $region10: #{focus_forward.1} parent=5 // pred_check_branch
      %132 = sbr.rel (%p129) target = $region12
    $region11: #{focus_forward.1} parent=5 // pred_region
      %s133 = ssub.s32 %s9, 1
      // Predicated region
      $region13: #{focus_forward.1} parent=11 // pred_check
        %p134 = pneg %p70
      $region14: #{focus_forward.1} parent=11 // pred_check_branch
        %136 = sbr.rel (%p134) target = $region16
      $region15: #{focus_forward.1} parent=11 // pred_region
        _
      $region16: #{focus_forward.1} parent=11 // pred_fallthru
        _
      // Predicated region
      $region17: #{focus_forward.1} parent=11 // pred_check
        %p137 = pneg %p91
      $region18: #{focus_forward.1} parent=11 // pred_check_branch
        %139 = sbr.rel (%p137) target = $region20
      $region19: #{focus_forward.1} parent=11 // pred_region
        _
      $region20: #{focus_forward.1} parent=11 // pred_fallthru
        _
    $region12: #{focus_forward.1} parent=5 // pred_fallthru
      _
    %p140 = scmp.lt.s32.totalorder %s9, 2
    // Predicated region
    $region21: #{focus_forward.1} parent=5 // pred_check
      %p141 = pneg %p140
    $region22: #{focus_forward.1} parent=5 // pred_check_branch
      %143 = sbr.rel (%p141) target = $region24
    $region23: #{focus_forward.1} parent=5 // pred_region
      // Predicated region
      $region25: #{focus_forward.1} parent=23 // pred_check
        %p144 = pneg %p43
      $region26: #{focus_forward.1} parent=23 // pred_check_branch
        %146 = sbr.rel (%p144) target = $region28
      $region27: #{focus_forward.1} parent=23 // pred_region
        %p147 = scmp.lt.s32.totalorder %s16, 1
        %s148 = scalar_select %p147, %s16, 1
        %p149 = scmp.lt.s32.totalorder %s17, 0
        %s150 = scalar_select %p149, %s17, 0
        %s151 = smul.addr %s148, 2
        %s152 = sadd.s32 %s150, %s151
        %s153 = smul.addr %s152, 8
        %s154 = scalar_lea.vmem %s0, %s153
      $region28: #{focus_forward.1} parent=23 // pred_fallthru
        _
    $region24: #{focus_forward.1} parent=5 // pred_fallthru
      _
    %p155 = scmp.le.s32.totalorder 1, %s9
    %p156 = scmp.lt.s32.totalorder %s9, 3
    %p157 = pnand %p155, %p156
    %p158 = pneg %p157
    // Predicated region
    $region29: #{focus_forward.1} parent=5 // pred_check
      _
    $region30: #{focus_forward.1} parent=5 // pred_check_branch
      %160 = sbr.rel (%p157) target = $region32
    $region31: #{focus_forward.1} parent=5 // pred_region
      %s161 = ssub.s32 %s9, 1
      %p162 = scmp.lt.s32.totalorder %s18, 1
      %s163 = scalar_select %p162, %s18, 1
      %p164 = scmp.lt.s32.totalorder %s19, 0
      %s165 = scalar_select %p164, %s19, 0
      %s166 = smul.addr %s163, 2
      %s167 = sadd.s32 %s165, %s166
      %s168 = smul.addr %s167, 8
      %s169 = scalar_lea.vmem %s0, %s168
      %p170 = pneg %p49
      %p171 = pneg %p46
      %p172 = pneg %p70
      %p173 = pneg %p67
      %p174 = pneg %p91
      %p175 = pneg %p88
      %p176 = pneg %p119
      %p177 = pneg %p116
      %p178 = scmp.lt.s32.totalorder %s18, 1
      %s179 = scalar_select %p178, %s18, 1
      %p180 = scmp.lt.s32.totalorder %s19, 0
      %s181 = scalar_select %p180, %s19, 0
      %s182 = sadd.s32 %s181, %s179
      %s183 = smul.addr %s182, 8
      %s184 = scalar_lea.vmem %s3, %s183
      %p185 = scmp.lt.s32.totalorder %s18, 1
      %s186 = scalar_select %p185, %s18, 1
      %p187 = scmp.lt.s32.totalorder %s19, 0
      %s188 = scalar_select %p187, %s19, 0
      %s189 = smul.addr %s186, 2
      %s190 = sadd.s32 %s188, %s189
      %s191 = smul.addr %s190, 8
      %s192 = scalar_lea.vmem %s0, %s191
      %p193 = scmp.lt.s32.totalorder %s18, 1
      %s194 = scalar_select %p193, %s18, 1
      %p195 = scmp.lt.s32.totalorder %s19, 0
      %s196 = scalar_select %p195, %s19, 0
      %s197 = sadd.s32 %s196, %s194
      %s198 = smul.addr %s197, 8
      %s199 = scalar_lea.vmem %s3, %s198
      %v200 = vld [vmem:[%s1] sm:$0xff]
      %v201 = vld [vmem:[%s192] sm:$0xff]
      %v202 = vld [vmem:[%s192 + $0x8] sm:$0xff]
      %v203 = vld [vmem:[%s2] sm:$0xff]
      %205 = vset.pattern.permute.xlu0 0
      %206 = vperm.xlu0 %205, %v203
      %v207 = vpop.permute.xlu0 %206
      %vm209 = vcmask 130048
      %v211 = vsel %vm209, %v200, 0
      %213 = vmatprep.subr.mxu0 0.0
      %v214 = vand.u32 %v201, 4294901760
      %215 = vmatpush1.msra.mxu0 %v214
      %216 = vmatprep.subr.mxu0 0.0
      %v217 = vand.u32 %v202, 4294901760
      %218 = vmatpush1.msra.mxu0 %v217
      %219 = vmatprep.subr.mxu0 0.0
      %220 = vmatpush1.msra.mxu0 0.0
      %221 = vmatprep.subr.mxu0 0.0
      %222 = vmatpush1.msra.mxu0 0.0
      %223 = vmatprep.subr.mxu0 0.0
      %224 = vmatpush1.msra.mxu0 0.0
      %225 = vmatprep.subr.mxu0 0.0
      %226 = vmatpush1.msra.mxu0 0.0
      %227 = vmatprep.subr.mxu0 0.0
      %228 = vmatpush1.msra.mxu0 0.0
      %229 = vmatprep.subr.mxu0 0.0
      %230 = vmatpush1.msra.mxu0 0.0
      %231 = vmatprep.subr.mxu0 0.0
      %232 = vmatpush1.msra.mxu0 0.0
      %233 = vmatprep.subr.mxu0 0.0
      %234 = vmatpush1.msra.mxu0 0.0
      %235 = vmatprep.subr.mxu0 0.0
      %236 = vmatpush1.msra.mxu0 0.0
      %237 = vmatprep.subr.mxu0 0.0
      %238 = vmatpush1.msra.mxu0 0.0
      %239 = vmatprep.subr.mxu0 0.0
      %240 = vmatpush1.msra.mxu0 0.0
      %241 = vmatprep.subr.mxu0 0.0
      %242 = vmatpush1.msra.mxu0 0.0
      %243 = vmatprep.subr.mxu0 0.0
      %244 = vmatpush1.msra.mxu0 0.0
      %245 = vmatprep.subr.mxu0 0.0
      %246 = vmatpush1.msra.mxu0 0.0
      %247 = vmatprep.subr.mxu0 0.0
      %248 = vmatpush1.msra.mxu0 0.0
      %249 = vmatprep.subr.mxu0 0.0
      %250 = vmatpush1.msra.mxu0 0.0
      %251 = vmatprep.subr.mxu0 0.0
      %252 = vmatpush1.msra.mxu0 0.0
      %253 = vmatprep.subr.mxu0 0.0
      %254 = vmatpush1.msra.mxu0 0.0
      %255 = vmatprep.subr.mxu0 0.0
      %256 = vmatpush1.msra.mxu0 0.0
      %257 = vmatprep.subr.mxu0 0.0
      %258 = vmatpush1.msra.mxu0 0.0
      %259 = vmatprep.subr.mxu0 0.0
      %260 = vmatpush1.msra.mxu0 0.0
      %261 = vmatprep.subr.mxu0 0.0
      %262 = vmatpush1.msra.mxu0 0.0
      %263 = vmatprep.subr.mxu0 0.0
      %264 = vmatpush1.msra.mxu0 0.0
      %265 = vmatprep.subr.mxu0 0.0
      %266 = vmatpush1.msra.mxu0 0.0
      %267 = vmatprep.subr.mxu0 0.0
      %268 = vmatpush1.msra.mxu0 0.0
      %269 = vmatprep.subr.mxu0 0.0
      %270 = vmatpush1.msra.mxu0 0.0
      %271 = vmatprep.subr.mxu0 0.0
      %272 = vmatpush1.msra.mxu0 0.0
      %273 = vmatprep.subr.mxu0 0.0
      %274 = vmatpush1.msra.mxu0 0.0
      %275 = vmatprep.subr.mxu0 0.0
      %276 = vmatpush1.msra.mxu0 0.0
      %277 = vmatprep.subr.mxu0 0.0
      %278 = vmatpush1.msra.mxu0 0.0
      %279 = vmatprep.mubr.f32.mxu0 0.0
      %v280 = vand.u32 %v211, 4294901760
      %v281 = vsub.f32 %v211, %v280
      %v282 = vand.u32 %v281, 4294901760
      %v283 = vsub.f32 %v281, %v282
      %v284 = vand.u32 %v283, 4294901760
      %285 = vmatmul.mubr.f32.gmra.mrb[0].mxu0 %v284
      %v286 = vpop.f32.mrb[0].mxu0
      %v287 = vadd.f32 %v207, %v286
      %v288 = vpop.f32.mrb[0].mxu0
      %289 = vdwg.mxu0
      %290 = vmatprep.subr.mxu0 0.0
      %v291 = vand.u32 %v201, 4294901760
      %v292 = vsub.f32 %v201, %v291
      %v293 = vand.u32 %v292, 4294901760
      %v294 = vsub.f32 %v292, %v293
      %v295 = vand.u32 %v294, 4294901760
      %296 = vmatpush1.msra.mxu0 %v295
      %297 = vmatprep.subr.mxu0 0.0
      %v298 = vand.u32 %v202, 4294901760
      %v299 = vsub.f32 %v202, %v298
      %v300 = vand.u32 %v299, 4294901760
      %v301 = vsub.f32 %v299, %v300
      %v302 = vand.u32 %v301, 4294901760
      %303 = vmatpush1.msra.mxu0 %v302
      %304 = vmatprep.subr.mxu0 0.0
      %305 = vmatpush1.msra.mxu0 0.0
      %306 = vmatprep.subr.mxu0 0.0
      %307 = vmatpush1.msra.mxu0 0.0
      %308 = vmatprep.subr.mxu0 0.0
      %309 = vmatpush1.msra.mxu0 0.0
      %310 = vmatprep.subr.mxu0 0.0
      %311 = vmatpush1.msra.mxu0 0.0
      %312 = vmatprep.subr.mxu0 0.0
      %313 = vmatpush1.msra.mxu0 0.0
      %314 = vmatprep.subr.mxu0 0.0
      %315 = vmatpush1.msra.mxu0 0.0
      %316 = vmatprep.subr.mxu0 0.0
      %317 = vmatpush1.msra.mxu0 0.0
      %318 = vmatprep.subr.mxu0 0.0
      %319 = vmatpush1.msra.mxu0 0.0
      %320 = vmatprep.subr.mxu0 0.0
      %321 = vmatpush1.msra.mxu0 0.0
      %322 = vmatprep.subr.mxu0 0.0
      %323 = vmatpush1.msra.mxu0 0.0
      %324 = vmatprep.subr.mxu0 0.0
      %325 = vmatpush1.msra.mxu0 0.0
      %326 = vmatprep.subr.mxu0 0.0
      %327 = vmatpush1.msra.mxu0 0.0
      %328 = vmatprep.subr.mxu0 0.0
      %329 = vmatpush1.msra.mxu0 0.0
      %330 = vmatprep.subr.mxu0 0.0
      %331 = vmatpush1.msra.mxu0 0.0
      %332 = vmatprep.subr.mxu0 0.0
      %333 = vmatpush1.msra.mxu0 0.0
      %334 = vmatprep.subr.mxu0 0.0
      %335 = vmatpush1.msra.mxu0 0.0
      %336 = vmatprep.subr.mxu0 0.0
      %337 = vmatpush1.msra.mxu0 0.0
      %338 = vmatprep.subr.mxu0 0.0
      %339 = vmatpush1.msra.mxu0 0.0
      %340 = vmatprep.subr.mxu0 0.0
      %341 = vmatpush1.msra.mxu0 0.0
      %342 = vmatprep.subr.mxu0 0.0
      %343 = vmatpush1.msra.mxu0 0.0
      %344 = vmatprep.subr.mxu0 0.0
      %345 = vmatpush1.msra.mxu0 0.0
      %346 = vmatprep.subr.mxu0 0.0
      %347 = vmatpush1.msra.mxu0 0.0
      %348 = vmatprep.subr.mxu0 0.0
      %349 = vmatpush1.msra.mxu0 0.0
      %350 = vmatprep.subr.mxu0 0.0
      %351 = vmatpush1.msra.mxu0 0.0
      %352 = vmatprep.subr.mxu0 0.0
      %353 = vmatpush1.msra.mxu0 0.0
      %354 = vmatprep.subr.mxu0 0.0
      %355 = vmatpush1.msra.mxu0 0.0
      %356 = vmatprep.subr.mxu0 0.0
      %357 = vmatpush1.msra.mxu0 0.0
      %358 = vmatprep.subr.mxu0 0.0
      %359 = vmatpush1.msra.mxu0 0.0
      %360 = vmatprep.subr.mxu0 0.0
      %361 = vmatpush1.msra.mxu0 0.0
      %362 = vmatprep.subr.mxu0 0.0
      %363 = vmatpush1.msra.mxu0 0.0
      %364 = vmatprep.mubr.f32.mxu0 0.0
      %v365 = vand.u32 %v211, 4294901760
      %366 = vmatmul.mubr.f32.gmra.mrb[0].mxu0 %v365
      %v367 = vpop.f32.mrb[0].mxu0
      %v368 = vadd.f32 %v287, %v367
      %v369 = vpop.f32.mrb[0].mxu0
      %370 = vdwg.mxu0
      %371 = vmatprep.subr.mxu0 0.0
      %v372 = vand.u32 %v201, 4294901760
      %v373 = vsub.f32 %v201, %v372
      %374 = vmatpush1.msra.mxu0 %v373
      %375 = vmatprep.subr.mxu0 0.0
      %v376 = vand.u32 %v202, 4294901760
      %v377 = vsub.f32 %v202, %v376
      %378 = vmatpush1.msra.mxu0 %v377
      %379 = vmatprep.subr.mxu0 0.0
      %380 = vmatpush1.msra.mxu0 0.0
      %381 = vmatprep.subr.mxu0 0.0
      %382 = vmatpush1.msra.mxu0 0.0
      %383 = vmatprep.subr.mxu0 0.0
      %384 = vmatpush1.msra.mxu0 0.0
      %385 = vmatprep.subr.mxu0 0.0
      %386 = vmatpush1.msra.mxu0 0.0
      %387 = vmatprep.subr.mxu0 0.0
      %388 = vmatpush1.msra.mxu0 0.0
      %389 = vmatprep.subr.mxu0 0.0
      %390 = vmatpush1.msra.mxu0 0.0
      %391 = vmatprep.subr.mxu0 0.0
      %392 = vmatpush1.msra.mxu0 0.0
      %393 = vmatprep.subr.mxu0 0.0
      %394 = vmatpush1.msra.mxu0 0.0
      %395 = vmatprep.subr.mxu0 0.0
      %396 = vmatpush1.msra.mxu0 0.0
      %397 = vmatprep.subr.mxu0 0.0
      %398 = vmatpush1.msra.mxu0 0.0
      %399 = vmatprep.subr.mxu0 0.0
      %400 = vmatpush1.msra.mxu0 0.0
      %401 = vmatprep.subr.mxu0 0.0
      %402 = vmatpush1.msra.mxu0 0.0
      %403 = vmatprep.subr.mxu0 0.0
      %404 = vmatpush1.msra.mxu0 0.0
      %405 = vmatprep.subr.mxu0 0.0
      %406 = vmatpush1.msra.mxu0 0.0
      %407 = vmatprep.subr.mxu0 0.0
      %408 = vmatpush1.msra.mxu0 0.0
      %409 = vmatprep.subr.mxu0 0.0
      %410 = vmatpush1.msra.mxu0 0.0
      %411 = vmatprep.subr.mxu0 0.0
      %412 = vmatpush1.msra.mxu0 0.0
      %413 = vmatprep.subr.mxu0 0.0
      %414 = vmatpush1.msra.mxu0 0.0
      %415 = vmatprep.subr.mxu0 0.0
      %416 = vmatpush1.msra.mxu0 0.0
      %417 = vmatprep.subr.mxu0 0.0
      %418 = vmatpush1.msra.mxu0 0.0
      %419 = vmatprep.subr.mxu0 0.0
      %420 = vmatpush1.msra.mxu0 0.0
      %421 = vmatprep.subr.mxu0 0.0
      %422 = vmatpush1.msra.mxu0 0.0
      %423 = vmatprep.subr.mxu0 0.0
      %424 = vmatpush1.msra.mxu0 0.0
      %425 = vmatprep.subr.mxu0 0.0
      %426 = vmatpush1.msra.mxu0 0.0
      %427 = vmatprep.subr.mxu0 0.0
      %428 = vmatpush1.msra.mxu0 0.0
      %429 = vmatprep.subr.mxu0 0.0
      %430 = vmatpush1.msra.mxu0 0.0
      %431 = vmatprep.subr.mxu0 0.0
      %432 = vmatpush1.msra.mxu0 0.0
      %433 = vmatprep.subr.mxu0 0.0
      %434 = vmatpush1.msra.mxu0 0.0
      %435 = vmatprep.subr.mxu0 0.0
      %436 = vmatpush1.msra.mxu0 0.0
      %437 = vmatprep.subr.mxu0 0.0
      %438 = vmatpush1.msra.mxu0 0.0
      %439 = vmatprep.mubr.f32.mxu0 0.0
      %v440 = vand.u32 %v211, 4294901760
      %v441 = vsub.f32 %v211, %v440
      %442 = vmatmul.mubr.f32.gmra.mrb[0].mxu0 %v441
      %v443 = vpop.f32.mrb[0].mxu0
      %v444 = vadd.f32 %v368, %v443
      %v445 = vpop.f32.mrb[0].mxu0
      %446 = vdwg.mxu0
      %447 = vmatprep.subr.mxu0 0.0
      %v448 = vand.u32 %v201, 4294901760
      %449 = vmatpush1.msra.mxu0 %v448
      %450 = vmatprep.subr.mxu0 0.0
      %v451 = vand.u32 %v202, 4294901760
      %452 = vmatpush1.msra.mxu0 %v451
      %453 = vmatprep.subr.mxu0 0.0
      %454 = vmatpush1.msra.mxu0 0.0
      %455 = vmatprep.subr.mxu0 0.0
      %456 = vmatpush1.msra.mxu0 0.0
      %457 = vmatprep.subr.mxu0 0.0
      %458 = vmatpush1.msra.mxu0 0.0
      %459 = vmatprep.subr.mxu0 0.0
      %460 = vmatpush1.msra.mxu0 0.0
      %461 = vmatprep.subr.mxu0 0.0
      %462 = vmatpush1.msra.mxu0 0.0
      %463 = vmatprep.subr.mxu0 0.0
      %464 = vmatpush1.msra.mxu0 0.0
      %465 = vmatprep.subr.mxu0 0.0
      %466 = vmatpush1.msra.mxu0 0.0
      %467 = vmatprep.subr.mxu0 0.0
      %468 = vmatpush1.msra.mxu0 0.0
      %469 = vmatprep.subr.mxu0 0.0
      %470 = vmatpush1.msra.mxu0 0.0
      %471 = vmatprep.subr.mxu0 0.0
      %472 = vmatpush1.msra.mxu0 0.0
      %473 = vmatprep.subr.mxu0 0.0
      %474 = vmatpush1.msra.mxu0 0.0
      %475 = vmatprep.subr.mxu0 0.0
      %476 = vmatpush1.msra.mxu0 0.0
      %477 = vmatprep.subr.mxu0 0.0
      %478 = vmatpush1.msra.mxu0 0.0
      %479 = vmatprep.subr.mxu0 0.0
      %480 = vmatpush1.msra.mxu0 0.0
      %481 = vmatprep.subr.mxu0 0.0
      %482 = vmatpush1.msra.mxu0 0.0
      %483 = vmatprep.subr.mxu0 0.0
      %484 = vmatpush1.msra.mxu0 0.0
      %485 = vmatprep.subr.mxu0 0.0
      %486 = vmatpush1.msra.mxu0 0.0
      %487 = vmatprep.subr.mxu0 0.0
      %488 = vmatpush1.msra.mxu0 0.0
      %489 = vmatprep.subr.mxu0 0.0
      %490 = vmatpush1.msra.mxu0 0.0
      %491 = vmatprep.subr.mxu0 0.0
      %492 = vmatpush1.msra.mxu0 0.0
      %493 = vmatprep.subr.mxu0 0.0
      %494 = vmatpush1.msra.mxu0 0.0
      %495 = vmatprep.subr.mxu0 0.0
      %496 = vmatpush1.msra.mxu0 0.0
      %497 = vmatprep.subr.mxu0 0.0
      %498 = vmatpush1.msra.mxu0 0.0
      %499 = vmatprep.subr.mxu0 0.0
      %500 = vmatpush1.msra.mxu0 0.0
      %501 = vmatprep.subr.mxu0 0.0
      %502 = vmatpush1.msra.mxu0 0.0
      %503 = vmatprep.subr.mxu0 0.0
      %504 = vmatpush1.msra.mxu0 0.0
      %505 = vmatprep.subr.mxu0 0.0
      %506 = vmatpush1.msra.mxu0 0.0
      %507 = vmatprep.subr.mxu0 0.0
      %508 = vmatpush1.msra.mxu0 0.0
      %509 = vmatprep.subr.mxu0 0.0
      %510 = vmatpush1.msra.mxu0 0.0
      %511 = vmatprep.subr.mxu0 0.0
      %512 = vmatpush1.msra.mxu0 0.0
      %513 = vmatprep.mubr.f32.mxu0 0.0
      %v514 = vand.u32 %v211, 4294901760
      %v515 = vsub.f32 %v211, %v514
      %v516 = vand.u32 %v515, 4294901760
      %517 = vmatmul.mubr.f32.gmra.mrb[0].mxu0 %v516
      %v518 = vpop.f32.mrb[0].mxu0
      %v519 = vadd.f32 %v444, %v518
      %v520 = vpop.f32.mrb[0].mxu0
      %521 = vdwg.mxu0
      %522 = vmatprep.subr.mxu0 0.0
      %v523 = vand.u32 %v201, 4294901760
      %v524 = vsub.f32 %v201, %v523
      %v525 = vand.u32 %v524, 4294901760
      %526 = vmatpush1.msra.mxu0 %v525
      %527 = vmatprep.subr.mxu0 0.0
      %v528 = vand.u32 %v202, 4294901760
      %v529 = vsub.f32 %v202, %v528
      %v530 = vand.u32 %v529, 4294901760
      %531 = vmatpush1.msra.mxu0 %v530
      %532 = vmatprep.subr.mxu0 0.0
      %533 = vmatpush1.msra.mxu0 0.0
      %534 = vmatprep.subr.mxu0 0.0
      %535 = vmatpush1.msra.mxu0 0.0
      %536 = vmatprep.subr.mxu0 0.0
      %537 = vmatpush1.msra.mxu0 0.0
      %538 = vmatprep.subr.mxu0 0.0
      %539 = vmatpush1.msra.mxu0 0.0
      %540 = vmatprep.subr.mxu0 0.0
      %541 = vmatpush1.msra.mxu0 0.0
      %542 = vmatprep.subr.mxu0 0.0
      %543 = vmatpush1.msra.mxu0 0.0
      %544 = vmatprep.subr.mxu0 0.0
      %545 = vmatpush1.msra.mxu0 0.0
      %546 = vmatprep.subr.mxu0 0.0
      %547 = vmatpush1.msra.mxu0 0.0
      %548 = vmatprep.subr.mxu0 0.0
      %549 = vmatpush1.msra.mxu0 0.0
      %550 = vmatprep.subr.mxu0 0.0
      %551 = vmatpush1.msra.mxu0 0.0
      %552 = vmatprep.subr.mxu0 0.0
      %553 = vmatpush1.msra.mxu0 0.0
      %554 = vmatprep.subr.mxu0 0.0
      %555 = vmatpush1.msra.mxu0 0.0
      %556 = vmatprep.subr.mxu0 0.0
      %557 = vmatpush1.msra.mxu0 0.0
      %558 = vmatprep.subr.mxu0 0.0
      %559 = vmatpush1.msra.mxu0 0.0
      %560 = vmatprep.subr.mxu0 0.0
      %561 = vmatpush1.msra.mxu0 0.0
      %562 = vmatprep.subr.mxu0 0.0
      %563 = vmatpush1.msra.mxu0 0.0
      %564 = vmatprep.subr.mxu0 0.0
      %565 = vmatpush1.msra.mxu0 0.0
      %566 = vmatprep.subr.mxu0 0.0
      %567 = vmatpush1.msra.mxu0 0.0
      %568 = vmatprep.subr.mxu0 0.0
      %569 = vmatpush1.msra.mxu0 0.0
      %570 = vmatprep.subr.mxu0 0.0
      %571 = vmatpush1.msra.mxu0 0.0
      %572 = vmatprep.subr.mxu0 0.0
      %573 = vmatpush1.msra.mxu0 0.0
      %574 = vmatprep.subr.mxu0 0.0
      %575 = vmatpush1.msra.mxu0 0.0
      %576 = vmatprep.subr.mxu0 0.0
      %577 = vmatpush1.msra.mxu0 0.0
      %578 = vmatprep.subr.mxu0 0.0
      %579 = vmatpush1.msra.mxu0 0.0
      %580 = vmatprep.subr.mxu0 0.0
      %581 = vmatpush1.msra.mxu0 0.0
      %582 = vmatprep.subr.mxu0 0.0
      %583 = vmatpush1.msra.mxu0 0.0
      %584 = vmatprep.subr.mxu0 0.0
      %585 = vmatpush1.msra.mxu0 0.0
      %586 = vmatprep.subr.mxu0 0.0
      %587 = vmatpush1.msra.mxu0 0.0
      %588 = vmatprep.subr.mxu0 0.0
      %589 = vmatpush1.msra.mxu0 0.0
      %590 = vmatprep.subr.mxu0 0.0
      %591 = vmatpush1.msra.mxu0 0.0
      %592 = vmatprep.mubr.f32.mxu0 0.0
      %v593 = vand.u32 %v211, 4294901760
      %594 = vmatmul.mubr.f32.gmra.mrb[0].mxu0 %v593
      %v595 = vpop.f32.mrb[0].mxu0
      %v596 = vadd.f32 %v519, %v595
      %v597 = vpop.f32.mrb[0].mxu0
      %598 = vdwg.mxu0
      %599 = vmatprep.subr.mxu0 0.0
      %v600 = vand.u32 %v201, 4294901760
      %601 = vmatpush1.msra.mxu0 %v600
      %602 = vmatprep.subr.mxu0 0.0
      %v603 = vand.u32 %v202, 4294901760
      %604 = vmatpush1.msra.mxu0 %v603
      %605 = vmatprep.subr.mxu0 0.0
      %606 = vmatpush1.msra.mxu0 0.0
      %607 = vmatprep.subr.mxu0 0.0
      %608 = vmatpush1.msra.mxu0 0.0
      %609 = vmatprep.subr.mxu0 0.0
      %610 = vmatpush1.msra.mxu0 0.0
      %611 = vmatprep.subr.mxu0 0.0
      %612 = vmatpush1.msra.mxu0 0.0
      %613 = vmatprep.subr.mxu0 0.0
      %614 = vmatpush1.msra.mxu0 0.0
      %615 = vmatprep.subr.mxu0 0.0
      %616 = vmatpush1.msra.mxu0 0.0
      %617 = vmatprep.subr.mxu0 0.0
      %618 = vmatpush1.msra.mxu0 0.0
      %619 = vmatprep.subr.mxu0 0.0
      %620 = vmatpush1.msra.mxu0 0.0
      %621 = vmatprep.subr.mxu0 0.0
      %622 = vmatpush1.msra.mxu0 0.0
      %623 = vmatprep.subr.mxu0 0.0
      %624 = vmatpush1.msra.mxu0 0.0
      %625 = vmatprep.subr.mxu0 0.0
      %626 = vmatpush1.msra.mxu0 0.0
      %627 = vmatprep.subr.mxu0 0.0
      %628 = vmatpush1.msra.mxu0 0.0
      %629 = vmatprep.subr.mxu0 0.0
      %630 = vmatpush1.msra.mxu0 0.0
      %631 = vmatprep.subr.mxu0 0.0
      %632 = vmatpush1.msra.mxu0 0.0
      %633 = vmatprep.subr.mxu0 0.0
      %634 = vmatpush1.msra.mxu0 0.0
      %635 = vmatprep.subr.mxu0 0.0
      %636 = vmatpush1.msra.mxu0 0.0
      %637 = vmatprep.subr.mxu0 0.0
      %638 = vmatpush1.msra.mxu0 0.0
      %639 = vmatprep.subr.mxu0 0.0
      %640 = vmatpush1.msra.mxu0 0.0
      %641 = vmatprep.subr.mxu0 0.0
      %642 = vmatpush1.msra.mxu0 0.0
      %643 = vmatprep.subr.mxu0 0.0
      %644 = vmatpush1.msra.mxu0 0.0
      %645 = vmatprep.subr.mxu0 0.0
      %646 = vmatpush1.msra.mxu0 0.0
      %647 = vmatprep.subr.mxu0 0.0
      %648 = vmatpush1.msra.mxu0 0.0
      %649 = vmatprep.subr.mxu0 0.0
      %650 = vmatpush1.msra.mxu0 0.0
      %651 = vmatprep.subr.mxu0 0.0
      %652 = vmatpush1.msra.mxu0 0.0
      %653 = vmatprep.subr.mxu0 0.0
      %654 = vmatpush1.msra.mxu0 0.0
      %655 = vmatprep.subr.mxu0 0.0
      %656 = vmatpush1.msra.mxu0 0.0
      %657 = vmatprep.subr.mxu0 0.0
      %658 = vmatpush1.msra.mxu0 0.0
      %659 = vmatprep.subr.mxu0 0.0
      %660 = vmatpush1.msra.mxu0 0.0
      %661 = vmatprep.subr.mxu0 0.0
      %662 = vmatpush1.msra.mxu0 0.0
      %663 = vmatprep.subr.mxu0 0.0
      %664 = vmatpush1.msra.mxu0 0.0
      %665 = vmatprep.mubr.f32.mxu0 0.0
      %v666 = vand.u32 %v211, 4294901760
      %667 = vmatmul.mubr.f32.gmra.mrb[0].mxu0 %v666
      %v668 = vpop.f32.mrb[0].mxu0
      %v669 = vadd.f32 %v596, %v668
      %v670 = vpop.f32.mrb[0].mxu0
      %671 = vdwg.mxu0
      %v672 = vxor.u32 %v669, 2147483648
      %v673 = vmul.f32 %v672, 1.442695
      %v674 = vpow.pop %v673
      %v675 = vadd.f32 %v674, 1.0
      %v676 = vrcp.pop %v675
      %v677 = vmul.f32 1.0, %v676
      %v678 = vmul.f32 %v669, %v677
      %vm679 = vcmask 523264
      %680 = vst.msk [vmem:[%s199] sm:$0xff] %vm679, %v678
      %p681 = scmp.lt.s32.totalorder %s18, 1
      %s682 = scalar_select %p681, %s18, 1
      %p683 = scmp.lt.s32.totalorder %s19, 0
      %s684 = scalar_select %p683, %s19, 0
      %s685 = sadd.s32 %s684, %s682
      %s686 = smul.addr %s685, 8
      %s687 = scalar_lea.vmem %s3, %s686
      // Predicated region
      $region33: #{focus_forward.1} parent=31 // pred_check
        %p688 = pneg %p116
      $region34: #{focus_forward.1} parent=31 // pred_check_branch
        %690 = sbr.rel (%p688) target = $region36
      $region35: #{focus_forward.1} parent=31 // pred_region
        _
      $region36: #{focus_forward.1} parent=31 // pred_fallthru
        _
    $region32: #{focus_forward.1} parent=5 // pred_fallthru
      _
    %p691 = scmp.le.s32.totalorder 2, %s9
    // Predicated region
    $region37: #{focus_forward.1} parent=5 // pred_check
      %p692 = pneg %p691
    $region38: #{focus_forward.1} parent=5 // pred_check_branch
      %694 = sbr.rel (%p692) target = $region40
    $region39: #{focus_forward.1} parent=5 // pred_region
      %s695 = ssub.s32 %s9, 2
      // Predicated region
      $region41: #{focus_forward.1} parent=39 // pred_check
        %p696 = pneg %p122
      $region42: #{focus_forward.1} parent=39 // pred_check_branch
        %698 = sbr.rel (%p696) target = $region44
      $region43: #{focus_forward.1} parent=39 // pred_region
        %p699 = scmp.lt.s32.totalorder %s20, 1
        %s700 = scalar_select %p699, %s20, 1
        %p701 = scmp.lt.s32.totalorder %s21, 0
        %s702 = scalar_select %p701, %s21, 0
        %s703 = sadd.s32 %s702, %s700
        %s704 = smul.addr %s703, 8
        %s705 = scalar_lea.vmem %s3, %s704
      $region44: #{focus_forward.1} parent=39 // pred_fallthru
        _
    $region40: #{focus_forward.1} parent=5 // pred_fallthru
      _
  $region6: #{focus_forward.1} parent=0 // loop_footer
    %s13 = sadd.s32 1, %s9
  $region7: #{focus_forward.1} parent=0 // loop_footer_branch
    %8 = sbr.rel target = $region3
  $region8: #{focus_forward.1} parent=0 // loop_exit
    _

</llo_original>
